<compile_context>
chip_gen: v7x
topology: tpu7x:2x2x1
jax: 0.10.0
libtpu: 0.0.40
codegen_flags: <defaults>
</compile_context>

<pallas_src>
import functools

import jax
import jax.numpy as jnp
from jax import lax
from jax.experimental import pallas as pl
from jax.experimental.pallas import tpu as pltpu

EPS = 1e-9
LANE = 128
SUBLANE = 8
VMEM_LIMIT_BYTES = 48 * 1024 * 1024    # explicit scoped-VMEM limit (fits v7x 64 MiB)
BLOCK_BUDGET_BYTES = 24 * 1024 * 1024  # block budget: double-buffered tiles + f32 temps


def _round_up(x, m):
    return (x + m - 1) // m * m


# ----------------------------- kernels ------------------------------------ #

def _masked_stats(x, n_valid, n_padded):
    """Row-wise biased mean/var over the lane axis, ignoring padded lanes."""
    inv_n = 1.0 / float(n_valid)
    if n_valid != n_padded:
        lane = lax.broadcasted_iota(jnp.int32, x.shape, dimension=x.ndim - 1)
        valid = lane < n_valid
        xs = jnp.where(valid, x, 0.0)
        mean = jnp.sum(xs, axis=-1, keepdims=True) * inv_n
        d = jnp.where(valid, xs - mean, 0.0)
    else:
        mean = jnp.sum(x, axis=-1, keepdims=True) * inv_n
        d = x - mean
    var = jnp.sum(d * d, axis=-1, keepdims=True) * inv_n  # two-pass biased var
    return mean, var


def _instnorm_kernel(x_ref, scale_ref, shift_ref, o_ref, *, hw, hw_p):
    # x_ref block: (RB, HWp) — RB instance rows (sublane-dense), HW lane-dense.
    x = x_ref[...].astype(jnp.float32)
    mean, var = _masked_stats(x, hw, hw_p)
    inv = lax.rsqrt(var + EPS)                            # per-row rsqrt (EUP)
    a = inv * scale_ref[...].astype(jnp.float32)          # fold gamma
    b = shift_ref[...].astype(jnp.float32) - mean * a     # fold beta
    o_ref[...] = (x * a + b).astype(o_ref.dtype)          # single FMA pass


def _instnorm_xo_kernel(x_ref, xo_ref, scale_ref, shift_ref, o_ref, *, hwo, hwo_p):
    # Same, but statistics come from x_o (the module's optional second arg).
    x = x_ref[...].astype(jnp.float32)
    xo = xo_ref[...].astype(jnp.float32)
    mean, var = _masked_stats(xo, hwo, hwo_p)
    inv = lax.rsqrt(var + EPS)
    a = inv * scale_ref[...].astype(jnp.float32)
    b = shift_ref[...].astype(jnp.float32) - mean * a
    o_ref[...] = (x * a + b).astype(o_ref.dtype)


# ----------------------------- wrapper ------------------------------------ #

def _pad_2d(x2d, rows_p, cols_p):
    r, c = x2d.shape
    if r == rows_p and c == cols_p:
        return x2d
    return jnp.pad(x2d, ((0, rows_p - r), (0, cols_p - c)))


def instance_norm(x_nchw, scale, shift, x_o=None):
    """InstanceNormalization.forward for NCHW input (PyTorch layout)."""
    N, C, H, W = x_nchw.shape
    HW = H * W
    HWp = _round_up(HW, LANE)
    R = N * C
    dtype = x_nchw.dtype

    x2 = x_nchw.reshape(R, HW)
    # Per-row affine params: row (n, c) uses scale[c] / shift[c].
    scale_rows = jnp.tile(scale.astype(jnp.float32), N).reshape(R, 1)
    shift_rows = jnp.tile(shift.astype(jnp.float32), N).reshape(R, 1)

    if x_o is not None:
        No, Co, Ho, Wo = x_o.shape
        assert No == N and Co == C, "x_o must match x in batch and channel dims"
        HWo = Ho * Wo
        HWop = _round_up(HWo, LANE)
        xo2 = x_o.reshape(R, HWo)
    else:
        HWop = 0

    # Row-block sizing: multiples of 8 sublanes, as many rows as fit the VMEM
    # budget (double-buffered in + out [+ x_o] blocks, f32 upcast headroom).
    bytes_per_row = 4 * (2 * HWp + 2 * HWp + (2 * HWop if x_o is not None else 0))
    rb_max = max(SUBLANE,
                 (BLOCK_BUDGET_BYTES // max(bytes_per_row, 1)) // SUBLANE * SUBLANE)
    Rp8 = _round_up(R, SUBLANE)
    if rb_max >= Rp8:
        RB = Rp8            # tiny/medium shapes: single grid step, one DMA in/out
        Rp = Rp8
    else:
        RB = rb_max         # split rows (instances), never H*W — stats stay exact
        Rp = _round_up(Rp8, RB)
    grid = (Rp // RB,)

    x2 = _pad_2d(x2, Rp, HWp)
    scale_rows = _pad_2d(scale_rows, Rp, 1)
    shift_rows = _pad_2d(shift_rows, Rp, 1)

    row_spec = pl.BlockSpec((RB, HWp), lambda r: (r, 0))
    par_spec = pl.BlockSpec((RB, 1), lambda r: (r, 0))
    cparams = pltpu.CompilerParams(
        dimension_semantics=("parallel",),
        vmem_limit_bytes=VMEM_LIMIT_BYTES,
    )

    if x_o is None:
        kernel = functools.partial(_instnorm_kernel, hw=HW, hw_p=HWp)
        out = pl.pallas_call(
            kernel,
            out_shape=jax.ShapeDtypeStruct((Rp, HWp), dtype),
            grid=grid,
            in_specs=[row_spec, par_spec, par_spec],
            out_specs=row_spec,
            compiler_params=cparams,
        )(x2, scale_rows, shift_rows)
    else:
        xo2 = _pad_2d(xo2, Rp, HWop)
        xo_spec = pl.BlockSpec((RB, HWop), lambda r: (r, 0))
        kernel = functools.partial(_instnorm_xo_kernel, hwo=HWo, hwo_p=HWop)
        out = pl.pallas_call(
            kernel,
            out_shape=jax.ShapeDtypeStruct((Rp, HWp), dtype),
            grid=grid,
            in_specs=[row_spec, xo_spec, par_spec, par_spec],
            out_specs=row_spec,
            compiler_params=cparams,
        )(x2, xo2, scale_rows, shift_rows)

    return out[:R, :HW].reshape(N, C, H, W)


instance_norm_jit = jax.jit(instance_norm)


# ----------------------------- pure-JAX reference -------------------------- #

def instance_norm_ref(x, scale, shift, x_o=None):
    if x_o is None:
        x_o = x
    mean = jnp.mean(x_o, axis=(2, 3), keepdims=True)
    var = jnp.mean((x_o - mean) ** 2, axis=(2, 3), keepdims=True)  # biased var
    out = (x - mean) / jnp.sqrt(var + EPS)
    return out * scale.reshape(1, -1, 1, 1) + shift.reshape(1, -1, 1, 1)


# ----------------------------- main ---------------------------------------- #

if __name__ == "__main__":
    N, C, H, W = 2, 4, 16, 16
    key = jax.random.PRNGKey(0)
    kx, ks = jax.random.split(key, 2)

    # PyTorch-style NCHW input.
    x = jax.random.normal(kx, (N, C, H, W), jnp.float32)
    # Parameters matching _reset_parameters(): scale ~ U[0,1), shift = 0.
    scale = jax.random.uniform(ks, (C,), jnp.float32, 0.0, 1.0)
    shift = jnp.zeros((C,), jnp.float32)

    out = instance_norm_jit(x, scale, shift)
    out = jax.block_until_ready(out)

    ref = instance_norm_ref(x, scale, shift)
    assert out.shape == (N, C, H, W)
    assert jnp.allclose(out, ref, atol=1e-4, rtol=1e-4), "mismatch vs reference (x_o=None)"

    # Optional x_o path (statistics from another tensor), also supported.
    xo = jax.random.normal(jax.random.fold_in(kx, 1), (N, C, H, W), jnp.float32)
    out2 = jax.block_until_ready(instance_norm(x, scale, shift, x_o=xo))
    ref2 = instance_norm_ref(x, scale, shift, x_o=xo)
    assert jnp.allclose(out2, ref2, atol=1e-4, rtol=1e-4), "mismatch vs reference (x_o)"

    # Non-128-aligned spatial size (exercises the lane-mask path).
    H3, W3 = 15, 15
    x3 = jax.random.normal(jax.random.fold_in(kx, 2), (N, C, H3, W3), jnp.float32)
    out3 = jax.block_until_ready(instance_norm(x3, scale, shift))
    ref3 = instance_norm_ref(x3, scale, shift)
    assert jnp.allclose(out3, ref3, atol=1e-4, rtol=1e-4), "mismatch vs reference (15x15)"

    print("KERNEL_OK")
</pallas_src>

<mosaic_0001>
module attributes {stable_mosaic.version = 11 : i64} {
  func.func @_instnorm_kernel(%arg0: i32, %arg1: memref<8x256xf32, #tpu.memory_space<vmem>>, %arg2: memref<8x1xf32, #tpu.memory_space<vmem>>, %arg3: memref<8x1xf32, #tpu.memory_space<vmem>>, %arg4: memref<8x256xf32, #tpu.memory_space<vmem>>) attributes {dimension_semantics = [#tpu.dimension_semantics<parallel>], iteration_bounds = array<i64: 1>, scalar_prefetch = 0 : i64, scratch_operands = 0 : i64, tpu.core_type = #tpu.core_type<tc>, window_params = [{transform_indices = @transform_0, window_bounds = array<i64: 8, 256>}, {transform_indices = @transform_1, window_bounds = array<i64: 8, 1>}, {transform_indices = @transform_2, window_bounds = array<i64: 8, 1>}, {transform_indices = @transform_3, window_bounds = array<i64: 8, 256>}]} {
    %c0 = arith.constant 0 : index
    %c0_0 = arith.constant 0 : index
    %0 = vector.load %arg1[%c0, %c0_0] : memref<8x256xf32, #tpu.memory_space<vmem>>, vector<8x256xf32>
    %cst = arith.constant dense<0.000000e+00> : vector<8xf32>
    %1 = vector.multi_reduction <add>, %0, %cst [1] : vector<8x256xf32> to vector<8xf32>
    %2 = vector.shape_cast %1 : vector<8xf32> to vector<8x1xf32>
    %cst_1 = arith.constant 3.906250e-03 : f32
    %3 = vector.broadcast %cst_1 : f32 to vector<8x1xf32>
    %4 = arith.mulf %2, %3 : vector<8x1xf32>
    %5 = vector.broadcast %4 : vector<8x1xf32> to vector<8x256xf32>
    %6 = arith.subf %0, %5 : vector<8x256xf32>
    %7 = arith.mulf %6, %6 : vector<8x256xf32>
    %cst_2 = arith.constant dense<0.000000e+00> : vector<8xf32>
    %8 = vector.multi_reduction <add>, %7, %cst_2 [1] : vector<8x256xf32> to vector<8xf32>
    %9 = vector.shape_cast %8 : vector<8xf32> to vector<8x1xf32>
    %cst_3 = arith.constant 3.906250e-03 : f32
    %10 = vector.broadcast %cst_3 : f32 to vector<8x1xf32>
    %11 = arith.mulf %9, %10 : vector<8x1xf32>
    %cst_4 = arith.constant 9.99999971E-10 : f32
    %12 = vector.broadcast %cst_4 : f32 to vector<8x1xf32>
    %13 = arith.addf %11, %12 : vector<8x1xf32>
    %14 = math.rsqrt %13 : vector<8x1xf32>
    %c0_5 = arith.constant 0 : index
    %c0_6 = arith.constant 0 : index
    %15 = vector.load %arg2[%c0_5, %c0_6] : memref<8x1xf32, #tpu.memory_space<vmem>>, vector<8x1xf32>
    %16 = arith.mulf %14, %15 : vector<8x1xf32>
    %c0_7 = arith.constant 0 : index
    %c0_8 = arith.constant 0 : index
    %17 = vector.load %arg3[%c0_7, %c0_8] : memref<8x1xf32, #tpu.memory_space<vmem>>, vector<8x1xf32>
    %18 = arith.mulf %4, %16 : vector<8x1xf32>
    %19 = arith.subf %17, %18 : vector<8x1xf32>
    %20 = vector.broadcast %16 : vector<8x1xf32> to vector<8x256xf32>
    %21 = arith.mulf %0, %20 : vector<8x256xf32>
    %22 = vector.broadcast %19 : vector<8x1xf32> to vector<8x256xf32>
    %23 = arith.addf %21, %22 : vector<8x256xf32>
    %c0_9 = arith.constant 0 : index
    %c0_10 = arith.constant 0 : index
    %24 = vector.load %arg4[%c0_9, %c0_10] : memref<8x256xf32, #tpu.memory_space<vmem>>, vector<8x256xf32>
    tpu.vector_store %arg4[%c0_9, %c0_10], %23 {strides = array<i32>} : memref<8x256xf32, #tpu.memory_space<vmem>>, vector<8x256xf32>,
    return
  }
  func.func @transform_0(%arg0: i32) -> (i32, i32) {
    %c0_i32 = arith.constant 0 : i32
    %c0_i32_0 = arith.constant 0 : i32
    return %arg0, %c0_i32 : i32, i32
  }
  func.func @transform_1(%arg0: i32) -> (i32, i32) {
    %c0_i32 = arith.constant 0 : i32
    %c0_i32_0 = arith.constant 0 : i32
    return %arg0, %c0_i32 : i32, i32
  }
  func.func @transform_2(%arg0: i32) -> (i32, i32) {
    %c0_i32 = arith.constant 0 : i32
    %c0_i32_0 = arith.constant 0 : i32
    return %arg0, %c0_i32 : i32, i32
  }
  func.func @transform_3(%arg0: i32) -> (i32, i32) {
    %c0_i32 = arith.constant 0 : i32
    %c0_i32_0 = arith.constant 0 : i32
    return %arg0, %c0_i32 : i32, i32
  }
}

</mosaic_0001>

<llo_original>
// kernel: tile.13
$region0: #{tile.13}
  #allocation0 [shape = 's32[1]{0}', space=sflag, size = 0x4, scoped, tag = 'scoped memory for tile.13']
  %s0 = inlined_call_operand.vmem [shape: f32[4], index: 0, kind: input, shape index: {}]
  %s1 = inlined_call_operand.vmem [shape: f32[2,4], index: 1, kind: output, shape index: {}]
  // Predicated region
  $region2: #{tile.13} parent=0 // pred_check
    _
  $region3: #{tile.13} parent=0 // pred_check_branch
    %3 = sbr.rel (0) target = $region5
  $region4: #{tile.13} parent=0 // pred_region
    _
  $region5: #{tile.13} parent=0 // pred_fallthru
    _
  %v4 = vld [vmem:[%s0] ss:$0 sm:$0xff]
  %5 = vst [vmem:[%s1] sm:$0x3] %v4

// kernel: tile.1
$region0: #{tile.1}
  %s0 = inlined_call_operand.vmem [shape: f32[2,4], index: 0, kind: input, shape index: {}]
  %s1 = inlined_call_operand.vmem [shape: f32[8,1], index: 1, kind: output, shape index: {}]
  $region1: #{tile.1} parent=0
    #allocation0 [shape = 'u8[4096]{0}', space=vmem, size = 0x1000, scoped, tag = 'scoped mem for input reshape']
    %s3 = sshllo.u32 0, 2
    %v4 = vld [vmem:[%s0] sm:%s3]
    %5 = vst [vmem:[#allocation0] sm:%s3] %v4
    %v6 = vld [vmem:[#allocation0] sm:$0x3]
    %vm7 = vcmask 7168
    %8 = vst.msk [vmem:[%s1] ss:$4 sm:$0x3] %vm7, %v6
    %v9 = vld [vmem:[#allocation0] sm:$0x3]
    %10 = vrot.lane.b32.xlu0 %v9, 127
    %v11 = vpop.permute.xlu0 %10
    %vm12 = vcmask 7168
    %s13 = scalar_lea.vmem %s1, 1
    %14 = vst.msk [vmem:[%s13] ss:$4 sm:$0x3] %vm12, %v11
    %v15 = vld [vmem:[#allocation0] sm:$0x3]
    %16 = vrot.lane.b32.xlu0 %v15, 126
    %v17 = vpop.permute.xlu0 %16
    %vm18 = vcmask 7168
    %s19 = scalar_lea.vmem %s1, 2
    %20 = vst.msk [vmem:[%s19] ss:$4 sm:$0x3] %vm18, %v17
    %v21 = vld [vmem:[#allocation0] sm:$0x3]
    %22 = vrot.lane.b32.xlu0 %v21, 125
    %v23 = vpop.permute.xlu0 %22
    %vm24 = vcmask 7168
    %s25 = scalar_lea.vmem %s1, 3
    %26 = vst.msk [vmem:[%s25] ss:$4 sm:$0x3] %vm24, %v23

// kernel: instance_norm.1
$region0: #{instance_norm.1}
  #allocation0 [shape = 'u32[]', space=smem, size = 0x4, offset = 0x4, fixed_abs, tag = 'smem constant byte address 0x4 - core index']
  #allocation1 [shape = 'u32[144,128]{1,0:T(1,128)}', space=vmem, size = 0x12000, scoped, tag = 'internal scratch']
  %s0 = inlined_call_operand.vmem [shape: f32[8,256], index: 0, kind: input, shape index: {}]
  %s1 = inlined_call_operand.vmem [shape: f32[8,1], index: 1, kind: input, shape index: {}]
  %s2 = inlined_call_operand.vmem [shape: f32[8,1], index: 2, kind: input, shape index: {}]
  %s3 = inlined_call_operand.vmem [shape: f32[8,256], index: 3, kind: output, shape index: {}]
  %s4 = sld [smem:[#allocation0]]
  $region22: #{instance_norm.1} parent=0
    _
  %s6 = ssub.s32 1, %s4
  %s7 = scalar_select 0, %s6, %s4
  // Predicated region
  $region2: #{instance_norm.1} parent=0 // pred_check
    _
  $region3: #{instance_norm.1} parent=0 // pred_check_branch
    %9 = sbr.rel (0) target = $region5
  $region4: #{instance_norm.1} parent=0 // pred_region
    _
  $region5: #{instance_norm.1} parent=0 // pred_fallthru
    _
  // Predicated region
  $region6: #{instance_norm.1} parent=0 // pred_check
    _
  $region7: #{instance_norm.1} parent=0 // pred_check_branch
    %11 = sbr.rel (0) target = $region9
  $region8: #{instance_norm.1} parent=0 // pred_region
    _
  $region9: #{instance_norm.1} parent=0 // pred_fallthru
    _
  // Predicated region
  $region10: #{instance_norm.1} parent=0 // pred_check
    _
  $region11: #{instance_norm.1} parent=0 // pred_check_branch
    %13 = sbr.rel (0) target = $region13
  $region12: #{instance_norm.1} parent=0 // pred_region
    _
  $region13: #{instance_norm.1} parent=0 // pred_fallthru
    _
  %v14 = vld [vmem:[%s0] sm:$0xff]
  %v15 = vld [vmem:[%s0 + $0x8] sm:$0xff]
  %v16 = vadd.f32 %v14, %v15
  %17 = vadd.xlane.f32.xlu0 %v16
  %v18 = vpop.xlane.xlu0 %17
  %v19 = vmul.f32 %v18, 0.00390625
  %v20 = vsub.f32 %v14, %v19
  %v21 = vsub.f32 %v15, %v19
  %v22 = vmul.f32 %v20, %v20
  %v23 = vmul.f32 %v21, %v21
  %v24 = vadd.f32 %v22, %v23
  %25 = vadd.xlane.f32.xlu0 %v24
  %v26 = vpop.xlane.xlu0 %25
  %v27 = vmul.f32 %v26, 0.00390625
  %v28 = vadd.f32 %v27, 1e-09
  %v29 = vrsqrt.pop %v28
  %v30 = vld [vmem:[%s1] sm:$0xff]
  %v31 = vmul.f32 %v29, %v30
  %v32 = vld [vmem:[%s2] sm:$0xff]
  %v33 = vmul.f32 %v19, %v31
  %v34 = vsub.f32 %v32, %v33
  %36 = vset.pattern.permute.xlu0 0
  %37 = vperm.xlu0 %36, %v31
  %v38 = vpop.permute.xlu0 %37
  %v40 = vmul.f32 %v14, %v38
  %v41 = vmul.f32 %v15, %v38
  %43 = vset.pattern.permute.xlu0 0
  %44 = vperm.xlu0 %43, %v34
  %v45 = vpop.permute.xlu0 %44
  %v47 = vadd.f32 %v40, %v45
  %v48 = vadd.f32 %v41, %v45
  %49 = vst [vmem:[%s3] sm:$0xff] %v47
  %50 = vst [vmem:[%s3 + $0x8] sm:$0xff] %v48
  // Predicated region
  $region14: #{instance_norm.1} parent=0 // pred_check
    _
  $region15: #{instance_norm.1} parent=0 // pred_check_branch
    %52 = sbr.rel (0) target = $region17
  $region16: #{instance_norm.1} parent=0 // pred_region
    _
  $region17: #{instance_norm.1} parent=0 // pred_fallthru
    _
  // Predicated region
  $region18: #{instance_norm.1} parent=0 // pred_check
    _
  $region19: #{instance_norm.1} parent=0 // pred_check_branch
    %54 = sbr.rel (0) target = $region21
  $region20: #{instance_norm.1} parent=0 // pred_region
    _
  $region21: #{instance_norm.1} parent=0 // pred_fallthru
    _

</llo_original>
